<compile_context>
chip_gen: v6e
topology: v6e:2x2x1
jax: 0.10.0
libtpu: 0.0.40
codegen_flags: <defaults>
</compile_context>

<pallas_src>
import functools

import jax
import jax.numpy as jnp
from jax import lax
from jax.experimental import pallas as pl
from jax.experimental.pallas import tpu as pltpu

SMOOTH_NR = 1e-5
SMOOTH_DR = 1e-5
_CHUNK = 8          # sublane rows per inner-loop step (one f32 vreg per channel)


def _cdiv(a, b):
    return -(-a // b)


def _round_up(a, b):
    return _cdiv(a, b) * b


def _sdfl_kernel(x_ref, t_ref, pg_ref, diff_ref, focal_ref, *,
                 n_classes, n_chunks, ns, ts, s_valid, needs_mask):
    """Grid = (B, hs, ns); s (axis 2) MUST stay the innermost 'arbitrary' axis
    because the per-(b, h) output blocks are accumulated across it."""
    h = pl.program_id(1)
    s = pl.program_id(2)

    # Zero the resident per-(batch, half) partial-sum blocks once, then always +=.
    @pl.when(s == 0)
    def _zero():
        pg_ref[...] = jnp.zeros_like(pg_ref)
        diff_ref[...] = jnp.zeros_like(diff_ref)
        focal_ref[...] = jnp.zeros_like(focal_ref)

    block_row0 = (h * ns + s) * ts      # global index of this block's first 128-row

    zero_vreg = jnp.zeros((_CHUNK, 128), jnp.float32)
    init = (
        tuple(zero_vreg for _ in range(n_classes)),   # per-class sum(p + |t|)
        tuple(zero_vreg for _ in range(n_classes)),   # per-class sum|p - t|
        zero_vreg,                                    # focal partial
    )

    def body(i, carry):
        pg_acc, diff_acc, focal_acc = carry
        base = pl.multiple_of(i * _CHUNK, _CHUNK)

        xs = [x_ref[0, c, pl.ds(base, _CHUNK), :].astype(jnp.float32)
              for c in range(n_classes)]
        tg = [t_ref[0, c, pl.ds(base, _CHUNK), :].astype(jnp.float32)
              for c in range(n_classes)]

        # Channel softmax as an elementwise max/sum chain over dense vregs
        # (single exp per class; log-softmax shares the same exponentials).
        m = xs[0]
        for c in range(1, n_classes):
            m = jnp.maximum(m, xs[c])
        zs = [xc - m for xc in xs]
        es = [jnp.exp(zc) for zc in zs]
        den = es[0]
        for c in range(1, n_classes):
            den = den + es[c]
        inv_den = 1.0 / den          # exact; approx reciprocal risks 1e-4 tolerance
        log_den = jnp.log(den)

        if needs_mask:
            # Zero-padded spatial columns: t == 0 already kills focal and
            # ground_o; only softmax p must be masked out of pred_o / |p - t|.
            ridx = block_row0 + base + lax.broadcasted_iota(
                jnp.int32, (_CHUNK, 128), 0)
            lidx = lax.broadcasted_iota(jnp.int32, (_CHUNK, 128), 1)
            maskf = ((ridx * 128 + lidx) < s_valid).astype(jnp.float32)

        new_pg, new_diff, focal_new = [], [], focal_acc
        for c in range(n_classes):
            p = es[c] * inv_den
            logp = zs[c] - log_den
            tc = tg[c]
            focal_new = focal_new - jnp.square(1.0 - p) * logp * tc
            if needs_mask:
                p = p * maskf
            new_pg.append(pg_acc[c] + p + jnp.abs(tc))
            new_diff.append(diff_acc[c] + jnp.abs(p - tc))
        return tuple(new_pg), tuple(new_diff), focal_new

    pg_acc, diff_acc, focal_acc = lax.fori_loop(0, n_chunks, body, init)

    # Tiny RMW into the resident output blocks (2*C+1 vregs per grid step).
    for c in range(n_classes):
        pg_ref[0, c] += pg_acc[c]
        diff_ref[0, c] += diff_acc[c]
    focal_ref[0] += focal_acc


def _plan_tiling(s_elems, n_classes, bytes_per_elem_sum, max_block_elems=None):
    """Pick (hs, ns, ts, n128_pad, vmem_limit).  ts = 128-rows per block."""
    n128 = _cdiv(s_elems, 128)

    # v7x megacore: split the spatial extent across 2 TensorCores when there is
    # enough work; harmless on single-TC v5e/v6e.
    hs = 2 if n128 >= 2 * _CHUNK else 1
    per_half = _cdiv(n128, hs)

    try:
        vmem_cap = int(pltpu.get_tpu_info().vmem_capacity_bytes)
    except Exception:   # pragma: no cover - conservative fallback (v7x floor)
        vmem_cap = 64 << 20

    # Rows-per-block bound: double-buffered inputs kept under ~1/3 of VMEM.
    bytes_per_row = n_classes * 128 * bytes_per_elem_sum
    rows_vmem = max(_CHUNK, (vmem_cap // 3) // max(1, 2 * bytes_per_row))

    target_elems = max_block_elems if max_block_elems else 512 * 1024
    rows_target = max(_CHUNK, target_elems // (n_classes * 128))

    ts_max = max(_CHUNK, (min(rows_vmem, rows_target) // _CHUNK) * _CHUNK)
    ns = max(1, _cdiv(per_half, ts_max))
    ts = _round_up(_cdiv(per_half, ns), _CHUNK)
    n128_pad = hs * ns * ts

    block_in_bytes = n_classes * ts * 128 * bytes_per_elem_sum
    out_bytes = (2 * n_classes + 1) * _CHUNK * 128 * 4
    vmem_needed = 2 * block_in_bytes + 2 * out_bytes + (4 << 20)
    vmem_limit = int(min(max(vmem_needed, 32 << 20), vmem_cap * 7 // 8))
    vmem_limit = max(vmem_limit, vmem_needed)
    return hs, ns, ts, n128_pad, vmem_limit


def soft_dice_focal_loss(inputs, targets, lambda_dice=1.0, lambda_focal=1.0,
                         max_block_elems=None):
    """inputs, targets: (B, C, *spatial) arrays.  Returns scalar f32 loss."""
    B, C = inputs.shape[0], inputs.shape[1]
    S = 1
    for d in inputs.shape[2:]:
        S *= d

    # Keep native dtype (bf16-friendly); cast to f32 inside the kernel.
    x = inputs.reshape(B, C, S)
    t = targets.reshape(B, C, S)

    bytes_sum = x.dtype.itemsize + t.dtype.itemsize
    hs, ns, ts, n128_pad, vmem_limit = _plan_tiling(S, C, bytes_sum,
                                                    max_block_elems)
    S_pad = n128_pad * 128
    if S_pad != S:
        x = jnp.pad(x, ((0, 0), (0, 0), (0, S_pad - S)))
        t = jnp.pad(t, ((0, 0), (0, 0), (0, S_pad - S)))
    x = x.reshape(B, C, n128_pad, 128)
    t = t.reshape(B, C, n128_pad, 128)

    kernel = functools.partial(
        _sdfl_kernel, n_classes=C, n_chunks=ts // _CHUNK, ns=ns, ts=ts,
        s_valid=S, needs_mask=(S_pad != S))

    pg_out, diff_out, focal_out = pl.pallas_call(
        kernel,
        out_shape=(
            jax.ShapeDtypeStruct((B * hs, C, _CHUNK, 128), jnp.float32),
            jax.ShapeDtypeStruct((B * hs, C, _CHUNK, 128), jnp.float32),
            jax.ShapeDtypeStruct((B * hs, _CHUNK, 128), jnp.float32),
        ),
        grid_spec=pltpu.PrefetchScalarGridSpec(
            num_scalar_prefetch=0,
            grid=(B, hs, ns),
            in_specs=[
                pl.BlockSpec((1, C, ts, 128), lambda b, h, s: (b, 0, h * ns + s, 0)),
                pl.BlockSpec((1, C, ts, 128), lambda b, h, s: (b, 0, h * ns + s, 0)),
            ],
            out_specs=[
                pl.BlockSpec((1, C, _CHUNK, 128),
                             lambda b, h, s: (b * hs + h, 0, 0, 0)),
                pl.BlockSpec((1, C, _CHUNK, 128),
                             lambda b, h, s: (b * hs + h, 0, 0, 0)),
                pl.BlockSpec((1, _CHUNK, 128),
                             lambda b, h, s: (b * hs + h, 0, 0)),
            ],
        ),
        compiler_params=pltpu.CompilerParams(
            dimension_semantics=("parallel", "parallel", "arbitrary"),
            vmem_limit_bytes=vmem_limit,
        ),
    )(x, t)

    # Tiny epilogue in plain JAX: combine spatial halves + lane partials.
    pg = pg_out.reshape(B, hs, C, _CHUNK, 128).sum(axis=(1, 3, 4))      # (B, C)
    diff = diff_out.reshape(B, hs, C, _CHUNK, 128).sum(axis=(1, 3, 4))  # (B, C)
    dice_bc = 1.0 - (pg - diff + SMOOTH_NR) / (pg + SMOOTH_DR)
    dice_mean = jnp.mean(dice_bc)
    focal_mean = jnp.sum(focal_out) / (B * C * S)
    return lambda_dice * dice_mean + lambda_focal * focal_mean


def reference_loss(inputs, targets, lambda_dice=1.0, lambda_focal=1.0):
    """Pure-JAX reference mirroring MONAI DiceLoss(soft_label)+FocalLoss(softmax)."""
    x = inputs.astype(jnp.float32)
    t = targets.astype(jnp.float32)
    logp = jax.nn.log_softmax(x, axis=1)
    p = jnp.exp(logp)
    focal = jnp.mean(-jnp.square(1.0 - p) * logp * t)
    red = tuple(range(2, x.ndim))
    pred_o = jnp.sum(jnp.abs(p), axis=red)
    ground_o = jnp.sum(jnp.abs(t), axis=red)
    diff = jnp.sum(jnp.abs(p - t), axis=red)
    two_tp = pred_o + ground_o - diff
    dice = jnp.mean(1.0 - (two_tp + SMOOTH_NR) / (pred_o + ground_o + SMOOTH_DR))
    return lambda_dice * dice + lambda_focal * focal


if __name__ == "__main__":
    key = jax.random.PRNGKey(0)

    def make_case(shape, k):
        k1, k2 = jax.random.split(k)
        logits = jax.random.normal(k1, shape, dtype=jnp.float32)
        targs = jax.nn.softmax(
            jax.random.normal(k2, shape, dtype=jnp.float32), axis=1)
        return logits, targs

    # (shape, max_block_elems):
    #  1) canonical small shape -> exercises spatial padding + in-kernel mask
    #  2) forces the hs=2 megacore split AND multi-step s accumulation (ns=2)
    #  3) ragged spatial (S=100) with C=3 (non-multiple-of-8 channel count)
    cases = [
        ((2, 4, 16, 16), None),
        ((1, 4, 64, 64), 4096),
        ((2, 3, 10, 10), None),
    ]
    keys = jax.random.split(key, len(cases))
    for (shape, max_blk), k in zip(cases, keys):
        logits, targs = make_case(shape, k)
        out = jax.block_until_ready(
            soft_dice_focal_loss(logits, targs, max_block_elems=max_blk))
        ref = jax.block_until_ready(reference_loss(logits, targs))
        assert jnp.isfinite(out), (shape, float(out))
        assert abs(float(out) - float(ref)) < 1e-4, (shape, float(out), float(ref))
    print("KERNEL_OK")
</pallas_src>

<mosaic_0001>
module attributes {stable_mosaic.version = 11 : i64} {
  func.func @_sdfl_kernel(%arg0: i32, %arg1: i32, %arg2: i32, %arg3: memref<1x4x8x128xf32, #tpu.memory_space<vmem>>, %arg4: memref<1x4x8x128xf32, #tpu.memory_space<vmem>>, %arg5: memref<1x4x8x128xf32, #tpu.memory_space<vmem>>, %arg6: memref<1x4x8x128xf32, #tpu.memory_space<vmem>>, %arg7: memref<1x8x128xf32, #tpu.memory_space<vmem>>) attributes {dimension_semantics = [#tpu.dimension_semantics<parallel>, #tpu.dimension_semantics<parallel>, #tpu.dimension_semantics<arbitrary>], iteration_bounds = array<i64: 2, 1, 1>, scalar_prefetch = 0 : i64, scratch_operands = 0 : i64, tpu.core_type = #tpu.core_type<tc>, window_params = [{transform_indices = @transform_0, window_bounds = array<i64: 1, 4, 8, 128>}, {transform_indices = @transform_1, window_bounds = array<i64: 1, 4, 8, 128>}, {transform_indices = @transform_2, window_bounds = array<i64: 1, 4, 8, 128>}, {transform_indices = @transform_3, window_bounds = array<i64: 1, 4, 8, 128>}, {transform_indices = @transform_4, window_bounds = array<i64: 1, 8, 128>}]} {
    %c0_i32 = arith.constant 0 : i32
    %0 = arith.cmpi eq, %arg2, %c0_i32 : i32
    %1 = arith.extui %0 : i1 to i32
    %c0_i32_0 = arith.constant 0 : i32
    %2 = arith.cmpi ne, %1, %c0_i32_0 : i32
    scf.if %2 {
      %cst_99 = arith.constant 0.000000e+00 : f32
      %176 = vector.broadcast %cst_99 : f32 to vector<1x4x8x128xf32>
      %c0_100 = arith.constant 0 : index
      %c0_101 = arith.constant 0 : index
      %c0_102 = arith.constant 0 : index
      %c0_103 = arith.constant 0 : index
      %177 = vector.load %arg5[%c0_100, %c0_101, %c0_102, %c0_103] : memref<1x4x8x128xf32, #tpu.memory_space<vmem>>, vector<1x4x8x128xf32>
      tpu.vector_store %arg5[%c0_100, %c0_101, %c0_102, %c0_103], %176 {strides = array<i32>} : memref<1x4x8x128xf32, #tpu.memory_space<vmem>>, vector<1x4x8x128xf32>,
      %cst_104 = arith.constant 0.000000e+00 : f32
      %178 = vector.broadcast %cst_104 : f32 to vector<1x4x8x128xf32>
      %c0_105 = arith.constant 0 : index
      %c0_106 = arith.constant 0 : index
      %c0_107 = arith.constant 0 : index
      %c0_108 = arith.constant 0 : index
      %179 = vector.load %arg6[%c0_105, %c0_106, %c0_107, %c0_108] : memref<1x4x8x128xf32, #tpu.memory_space<vmem>>, vector<1x4x8x128xf32>
      tpu.vector_store %arg6[%c0_105, %c0_106, %c0_107, %c0_108], %178 {strides = array<i32>} : memref<1x4x8x128xf32, #tpu.memory_space<vmem>>, vector<1x4x8x128xf32>,
      %cst_109 = arith.constant 0.000000e+00 : f32
      %180 = vector.broadcast %cst_109 : f32 to vector<1x8x128xf32>
      %c0_110 = arith.constant 0 : index
      %c0_111 = arith.constant 0 : index
      %c0_112 = arith.constant 0 : index
      %181 = vector.load %arg7[%c0_110, %c0_111, %c0_112] : memref<1x8x128xf32, #tpu.memory_space<vmem>>, vector<1x8x128xf32>
      tpu.vector_store %arg7[%c0_110, %c0_111, %c0_112], %180 {strides = array<i32>} : memref<1x8x128xf32, #tpu.memory_space<vmem>>, vector<1x8x128xf32>,
    } else {
    }
    %c1_i32 = arith.constant 1 : i32
    %3 = arith.muli %arg1, %c1_i32 : i32
    %4 = arith.addi %3, %arg2 : i32
    %c8_i32 = arith.constant 8 : i32
    %5 = arith.muli %4, %c8_i32 : i32
    %cst = arith.constant 0.000000e+00 : f32
    %6 = vector.broadcast %cst : f32 to vector<8x128xf32>
    %c0_i32_1 = arith.constant 0 : i32
    %c8_i32_2 = arith.constant 8 : i32
    %7 = arith.muli %c0_i32_1, %c8_i32_2 : i32
    %8 = tpu.assume_multiple %7, 8 : i32
    %c0 = arith.constant 0 : index
    %c0_3 = arith.constant 0 : index
    %9 = arith.index_cast %8 : i32 to index
    %c0_4 = arith.constant 0 : index
    %10 = vector.load %arg3[%c0, %c0_3, %9, %c0_4] : memref<1x4x8x128xf32, #tpu.memory_space<vmem>>, vector<1x1x8x128xf32>
    %11 = vector.shape_cast %10 : vector<1x1x8x128xf32> to vector<8x128xf32>
    %c0_5 = arith.constant 0 : index
    %c1 = arith.constant 1 : index
    %12 = arith.index_cast %8 : i32 to index
    %c0_6 = arith.constant 0 : index
    %13 = vector.load %arg3[%c0_5, %c1, %12, %c0_6] : memref<1x4x8x128xf32, #tpu.memory_space<vmem>>, vector<1x1x8x128xf32>
    %14 = vector.shape_cast %13 : vector<1x1x8x128xf32> to vector<8x128xf32>
    %c0_7 = arith.constant 0 : index
    %c2 = arith.constant 2 : index
    %15 = arith.index_cast %8 : i32 to index
    %c0_8 = arith.constant 0 : index
    %16 = vector.load %arg3[%c0_7, %c2, %15, %c0_8] : memref<1x4x8x128xf32, #tpu.memory_space<vmem>>, vector<1x1x8x128xf32>
    %17 = vector.shape_cast %16 : vector<1x1x8x128xf32> to vector<8x128xf32>
    %c0_9 = arith.constant 0 : index
    %c3 = arith.constant 3 : index
    %18 = arith.index_cast %8 : i32 to index
    %c0_10 = arith.constant 0 : index
    %19 = vector.load %arg3[%c0_9, %c3, %18, %c0_10] : memref<1x4x8x128xf32, #tpu.memory_space<vmem>>, vector<1x1x8x128xf32>
    %20 = vector.shape_cast %19 : vector<1x1x8x128xf32> to vector<8x128xf32>
    %c0_11 = arith.constant 0 : index
    %c0_12 = arith.constant 0 : index
    %21 = arith.index_cast %8 : i32 to index
    %c0_13 = arith.constant 0 : index
    %22 = vector.load %arg4[%c0_11, %c0_12, %21, %c0_13] : memref<1x4x8x128xf32, #tpu.memory_space<vmem>>, vector<1x1x8x128xf32>
    %23 = vector.shape_cast %22 : vector<1x1x8x128xf32> to vector<8x128xf32>
    %c0_14 = arith.constant 0 : index
    %c1_15 = arith.constant 1 : index
    %24 = arith.index_cast %8 : i32 to index
    %c0_16 = arith.constant 0 : index
    %25 = vector.load %arg4[%c0_14, %c1_15, %24, %c0_16] : memref<1x4x8x128xf32, #tpu.memory_space<vmem>>, vector<1x1x8x128xf32>
    %26 = vector.shape_cast %25 : vector<1x1x8x128xf32> to vector<8x128xf32>
    %c0_17 = arith.constant 0 : index
    %c2_18 = arith.constant 2 : index
    %27 = arith.index_cast %8 : i32 to index
    %c0_19 = arith.constant 0 : index
    %28 = vector.load %arg4[%c0_17, %c2_18, %27, %c0_19] : memref<1x4x8x128xf32, #tpu.memory_space<vmem>>, vector<1x1x8x128xf32>
    %29 = vector.shape_cast %28 : vector<1x1x8x128xf32> to vector<8x128xf32>
    %c0_20 = arith.constant 0 : index
    %c3_21 = arith.constant 3 : index
    %30 = arith.index_cast %8 : i32 to index
    %c0_22 = arith.constant 0 : index
    %31 = vector.load %arg4[%c0_20, %c3_21, %30, %c0_22] : memref<1x4x8x128xf32, #tpu.memory_space<vmem>>, vector<1x1x8x128xf32>
    %32 = vector.shape_cast %31 : vector<1x1x8x128xf32> to vector<8x128xf32>
    %33 = arith.maximumf %11, %14 : vector<8x128xf32>
    %34 = arith.maximumf %33, %17 : vector<8x128xf32>
    %35 = arith.maximumf %34, %20 : vector<8x128xf32>
    %36 = arith.subf %11, %35 : vector<8x128xf32>
    %37 = arith.subf %14, %35 : vector<8x128xf32>
    %38 = arith.subf %17, %35 : vector<8x128xf32>
    %39 = arith.subf %20, %35 : vector<8x128xf32>
    %40 = math.exp %36 : vector<8x128xf32>
    %41 = math.exp %37 : vector<8x128xf32>
    %42 = math.exp %38 : vector<8x128xf32>
    %43 = math.exp %39 : vector<8x128xf32>
    %44 = arith.addf %40, %41 : vector<8x128xf32>
    %45 = arith.addf %44, %42 : vector<8x128xf32>
    %46 = arith.addf %45, %43 : vector<8x128xf32>
    %cst_23 = arith.constant 1.000000e+00 : f32
    %47 = vector.broadcast %cst_23 : f32 to vector<8x128xf32>
    %48 = arith.divf %47, %46 : vector<8x128xf32>
    %49 = math.log %46 : vector<8x128xf32>
    %50 = arith.addi %5, %8 : i32
    %51 = tpu.iota {dimensions = array<i32: 0>} : vector<8x128xi32>
    %52 = vector.broadcast %50 : i32 to vector<8x128xi32>
    %53 = arith.addi %52, %51 : vector<8x128xi32>
    %54 = tpu.iota {dimensions = array<i32: 1>} : vector<8x128xi32>
    %c128_i32 = arith.constant 128 : i32
    %55 = vector.broadcast %c128_i32 : i32 to vector<8x128xi32>
    %56 = arith.muli %53, %55 : vector<8x128xi32>
    %57 = arith.addi %56, %54 : vector<8x128xi32>
    %c256_i32 = arith.constant 256 : i32
    %58 = vector.broadcast %c256_i32 : i32 to vector<8x128xi32>
    %59 = arith.cmpi slt, %57, %58 : vector<8x128xi32>
    %60 = arith.extui %59 : vector<8x128xi1> to vector<8x128xi32>
    %61 = arith.sitofp %60 : vector<8x128xi32> to vector<8x128xf32>
    %62 = arith.mulf %40, %48 : vector<8x128xf32>
    %63 = arith.subf %36, %49 : vector<8x128xf32>
    %cst_24 = arith.constant 1.000000e+00 : f32
    %64 = vector.broadcast %cst_24 : f32 to vector<8x128xf32>
    %65 = arith.subf %64, %62 : vector<8x128xf32>
    %66 = arith.mulf %65, %65 : vector<8x128xf32>
    %67 = arith.mulf %66, %63 : vector<8x128xf32>
    %68 = arith.mulf %67, %23 : vector<8x128xf32>
    %69 = arith.subf %6, %68 : vector<8x128xf32>
    %70 = arith.mulf %62, %61 : vector<8x128xf32>
    %71 = arith.addf %6, %70 : vector<8x128xf32>
    %72 = math.absf %23 : vector<8x128xf32>
    %73 = arith.addf %71, %72 : vector<8x128xf32>
    %74 = arith.subf %70, %23 : vector<8x128xf32>
    %75 = math.absf %74 : vector<8x128xf32>
    %76 = arith.addf %6, %75 : vector<8x128xf32>
    %77 = arith.mulf %41, %48 : vector<8x128xf32>
    %78 = arith.subf %37, %49 : vector<8x128xf32>
    %cst_25 = arith.constant 1.000000e+00 : f32
    %79 = vector.broadcast %cst_25 : f32 to vector<8x128xf32>
    %80 = arith.subf %79, %77 : vector<8x128xf32>
    %81 = arith.mulf %80, %80 : vector<8x128xf32>
    %82 = arith.mulf %81, %78 : vector<8x128xf32>
    %83 = arith.mulf %82, %26 : vector<8x128xf32>
    %84 = arith.subf %69, %83 : vector<8x128xf32>
    %85 = arith.mulf %77, %61 : vector<8x128xf32>
    %86 = arith.addf %6, %85 : vector<8x128xf32>
    %87 = math.absf %26 : vector<8x128xf32>
    %88 = arith.addf %86, %87 : vector<8x128xf32>
    %89 = arith.subf %85, %26 : vector<8x128xf32>
    %90 = math.absf %89 : vector<8x128xf32>
    %91 = arith.addf %6, %90 : vector<8x128xf32>
    %92 = arith.mulf %42, %48 : vector<8x128xf32>
    %93 = arith.subf %38, %49 : vector<8x128xf32>
    %cst_26 = arith.constant 1.000000e+00 : f32
    %94 = vector.broadcast %cst_26 : f32 to vector<8x128xf32>
    %95 = arith.subf %94, %92 : vector<8x128xf32>
    %96 = arith.mulf %95, %95 : vector<8x128xf32>
    %97 = arith.mulf %96, %93 : vector<8x128xf32>
    %98 = arith.mulf %97, %29 : vector<8x128xf32>
    %99 = arith.subf %84, %98 : vector<8x128xf32>
    %100 = arith.mulf %92, %61 : vector<8x128xf32>
    %101 = arith.addf %6, %100 : vector<8x128xf32>
    %102 = math.absf %29 : vector<8x128xf32>
    %103 = arith.addf %101, %102 : vector<8x128xf32>
    %104 = arith.subf %100, %29 : vector<8x128xf32>
    %105 = math.absf %104 : vector<8x128xf32>
    %106 = arith.addf %6, %105 : vector<8x128xf32>
    %107 = arith.mulf %43, %48 : vector<8x128xf32>
    %108 = arith.subf %39, %49 : vector<8x128xf32>
    %cst_27 = arith.constant 1.000000e+00 : f32
    %109 = vector.broadcast %cst_27 : f32 to vector<8x128xf32>
    %110 = arith.subf %109, %107 : vector<8x128xf32>
    %111 = arith.mulf %110, %110 : vector<8x128xf32>
    %112 = arith.mulf %111, %108 : vector<8x128xf32>
    %113 = arith.mulf %112, %32 : vector<8x128xf32>
    %114 = arith.subf %99, %113 : vector<8x128xf32>
    %115 = arith.mulf %107, %61 : vector<8x128xf32>
    %116 = arith.addf %6, %115 : vector<8x128xf32>
    %117 = math.absf %32 : vector<8x128xf32>
    %118 = arith.addf %116, %117 : vector<8x128xf32>
    %119 = arith.subf %115, %32 : vector<8x128xf32>
    %120 = math.absf %119 : vector<8x128xf32>
    %121 = arith.addf %6, %120 : vector<8x128xf32>
    %c1_i32_28 = arith.constant 1 : i32
    %c0_29 = arith.constant 0 : index
    %c0_30 = arith.constant 0 : index
    %c0_31 = arith.constant 0 : index
    %c0_32 = arith.constant 0 : index
    %122 = vector.load %arg5[%c0_29, %c0_30, %c0_31, %c0_32] : memref<1x4x8x128xf32, #tpu.memory_space<vmem>>, vector<1x1x8x128xf32>
    %123 = vector.shape_cast %122 : vector<1x1x8x128xf32> to vector<8x128xf32>
    %124 = arith.addf %123, %73 : vector<8x128xf32>
    %c0_33 = arith.constant 0 : index
    %c0_34 = arith.constant 0 : index
    %c0_35 = arith.constant 0 : index
    %c0_36 = arith.constant 0 : index
    %125 = vector.load %arg5[%c0_33, %c0_34, %c0_35, %c0_36] : memref<1x4x8x128xf32, #tpu.memory_space<vmem>>, vector<1x1x8x128xf32>
    %126 = vector.shape_cast %125 : vector<1x1x8x128xf32> to vector<8x128xf32>
    %127 = vector.shape_cast %124 : vector<8x128xf32> to vector<1x1x8x128xf32>
    tpu.vector_store %arg5[%c0_33, %c0_34, %c0_35, %c0_36], %127 {strides = array<i32>} : memref<1x4x8x128xf32, #tpu.memory_space<vmem>>, vector<1x1x8x128xf32>,
    %c0_37 = arith.constant 0 : index
    %c0_38 = arith.constant 0 : index
    %c0_39 = arith.constant 0 : index
    %c0_40 = arith.constant 0 : index
    %128 = vector.load %arg6[%c0_37, %c0_38, %c0_39, %c0_40] : memref<1x4x8x128xf32, #tpu.memory_space<vmem>>, vector<1x1x8x128xf32>
    %129 = vector.shape_cast %128 : vector<1x1x8x128xf32> to vector<8x128xf32>
    %130 = arith.addf %129, %76 : vector<8x128xf32>
    %c0_41 = arith.constant 0 : index
    %c0_42 = arith.constant 0 : index
    %c0_43 = arith.constant 0 : index
    %c0_44 = arith.constant 0 : index
    %131 = vector.load %arg6[%c0_41, %c0_42, %c0_43, %c0_44] : memref<1x4x8x128xf32, #tpu.memory_space<vmem>>, vector<1x1x8x128xf32>
    %132 = vector.shape_cast %131 : vector<1x1x8x128xf32> to vector<8x128xf32>
    %133 = vector.shape_cast %130 : vector<8x128xf32> to vector<1x1x8x128xf32>
    tpu.vector_store %arg6[%c0_41, %c0_42, %c0_43, %c0_44], %133 {strides = array<i32>} : memref<1x4x8x128xf32, #tpu.memory_space<vmem>>, vector<1x1x8x128xf32>,
    %c0_45 = arith.constant 0 : index
    %c1_46 = arith.constant 1 : index
    %c0_47 = arith.constant 0 : index
    %c0_48 = arith.constant 0 : index
    %134 = vector.load %arg5[%c0_45, %c1_46, %c0_47, %c0_48] : memref<1x4x8x128xf32, #tpu.memory_space<vmem>>, vector<1x1x8x128xf32>
    %135 = vector.shape_cast %134 : vector<1x1x8x128xf32> to vector<8x128xf32>
    %136 = arith.addf %135, %88 : vector<8x128xf32>
    %c0_49 = arith.constant 0 : index
    %c1_50 = arith.constant 1 : index
    %c0_51 = arith.constant 0 : index
    %c0_52 = arith.constant 0 : index
    %137 = vector.load %arg5[%c0_49, %c1_50, %c0_51, %c0_52] : memref<1x4x8x128xf32, #tpu.memory_space<vmem>>, vector<1x1x8x128xf32>
    %138 = vector.shape_cast %137 : vector<1x1x8x128xf32> to vector<8x128xf32>
    %139 = vector.shape_cast %136 : vector<8x128xf32> to vector<1x1x8x128xf32>
    tpu.vector_store %arg5[%c0_49, %c1_50, %c0_51, %c0_52], %139 {strides = array<i32>} : memref<1x4x8x128xf32, #tpu.memory_space<vmem>>, vector<1x1x8x128xf32>,
    %c0_53 = arith.constant 0 : index
    %c1_54 = arith.constant 1 : index
    %c0_55 = arith.constant 0 : index
    %c0_56 = arith.constant 0 : index
    %140 = vector.load %arg6[%c0_53, %c1_54, %c0_55, %c0_56] : memref<1x4x8x128xf32, #tpu.memory_space<vmem>>, vector<1x1x8x128xf32>
    %141 = vector.shape_cast %140 : vector<1x1x8x128xf32> to vector<8x128xf32>
    %142 = arith.addf %141, %91 : vector<8x128xf32>
    %c0_57 = arith.constant 0 : index
    %c1_58 = arith.constant 1 : index
    %c0_59 = arith.constant 0 : index
    %c0_60 = arith.constant 0 : index
    %143 = vector.load %arg6[%c0_57, %c1_58, %c0_59, %c0_60] : memref<1x4x8x128xf32, #tpu.memory_space<vmem>>, vector<1x1x8x128xf32>
    %144 = vector.shape_cast %143 : vector<1x1x8x128xf32> to vector<8x128xf32>
    %145 = vector.shape_cast %142 : vector<8x128xf32> to vector<1x1x8x128xf32>
    tpu.vector_store %arg6[%c0_57, %c1_58, %c0_59, %c0_60], %145 {strides = array<i32>} : memref<1x4x8x128xf32, #tpu.memory_space<vmem>>, vector<1x1x8x128xf32>,
    %c0_61 = arith.constant 0 : index
    %c2_62 = arith.constant 2 : index
    %c0_63 = arith.constant 0 : index
    %c0_64 = arith.constant 0 : index
    %146 = vector.load %arg5[%c0_61, %c2_62, %c0_63, %c0_64] : memref<1x4x8x128xf32, #tpu.memory_space<vmem>>, vector<1x1x8x128xf32>
    %147 = vector.shape_cast %146 : vector<1x1x8x128xf32> to vector<8x128xf32>
    %148 = arith.addf %147, %103 : vector<8x128xf32>
    %c0_65 = arith.constant 0 : index
    %c2_66 = arith.constant 2 : index
    %c0_67 = arith.constant 0 : index
    %c0_68 = arith.constant 0 : index
    %149 = vector.load %arg5[%c0_65, %c2_66, %c0_67, %c0_68] : memref<1x4x8x128xf32, #tpu.memory_space<vmem>>, vector<1x1x8x128xf32>
    %150 = vector.shape_cast %149 : vector<1x1x8x128xf32> to vector<8x128xf32>
    %151 = vector.shape_cast %148 : vector<8x128xf32> to vector<1x1x8x128xf32>
    tpu.vector_store %arg5[%c0_65, %c2_66, %c0_67, %c0_68], %151 {strides = array<i32>} : memref<1x4x8x128xf32, #tpu.memory_space<vmem>>, vector<1x1x8x128xf32>,
    %c0_69 = arith.constant 0 : index
    %c2_70 = arith.constant 2 : index
    %c0_71 = arith.constant 0 : index
    %c0_72 = arith.constant 0 : index
    %152 = vector.load %arg6[%c0_69, %c2_70, %c0_71, %c0_72] : memref<1x4x8x128xf32, #tpu.memory_space<vmem>>, vector<1x1x8x128xf32>
    %153 = vector.shape_cast %152 : vector<1x1x8x128xf32> to vector<8x128xf32>
    %154 = arith.addf %153, %106 : vector<8x128xf32>
    %c0_73 = arith.constant 0 : index
    %c2_74 = arith.constant 2 : index
    %c0_75 = arith.constant 0 : index
    %c0_76 = arith.constant 0 : index
    %155 = vector.load %arg6[%c0_73, %c2_74, %c0_75, %c0_76] : memref<1x4x8x128xf32, #tpu.memory_space<vmem>>, vector<1x1x8x128xf32>
    %156 = vector.shape_cast %155 : vector<1x1x8x128xf32> to vector<8x128xf32>
    %157 = vector.shape_cast %154 : vector<8x128xf32> to vector<1x1x8x128xf32>
    tpu.vector_store %arg6[%c0_73, %c2_74, %c0_75, %c0_76], %157 {strides = array<i32>} : memref<1x4x8x128xf32, #tpu.memory_space<vmem>>, vector<1x1x8x128xf32>,
    %c0_77 = arith.constant 0 : index
    %c3_78 = arith.constant 3 : index
    %c0_79 = arith.constant 0 : index
    %c0_80 = arith.constant 0 : index
    %158 = vector.load %arg5[%c0_77, %c3_78, %c0_79, %c0_80] : memref<1x4x8x128xf32, #tpu.memory_space<vmem>>, vector<1x1x8x128xf32>
    %159 = vector.shape_cast %158 : vector<1x1x8x128xf32> to vector<8x128xf32>
    %160 = arith.addf %159, %118 : vector<8x128xf32>
    %c0_81 = arith.constant 0 : index
    %c3_82 = arith.constant 3 : index
    %c0_83 = arith.constant 0 : index
    %c0_84 = arith.constant 0 : index
    %161 = vector.load %arg5[%c0_81, %c3_82, %c0_83, %c0_84] : memref<1x4x8x128xf32, #tpu.memory_space<vmem>>, vector<1x1x8x128xf32>
    %162 = vector.shape_cast %161 : vector<1x1x8x128xf32> to vector<8x128xf32>
    %163 = vector.shape_cast %160 : vector<8x128xf32> to vector<1x1x8x128xf32>
    tpu.vector_store %arg5[%c0_81, %c3_82, %c0_83, %c0_84], %163 {strides = array<i32>} : memref<1x4x8x128xf32, #tpu.memory_space<vmem>>, vector<1x1x8x128xf32>,
    %c0_85 = arith.constant 0 : index
    %c3_86 = arith.constant 3 : index
    %c0_87 = arith.constant 0 : index
    %c0_88 = arith.constant 0 : index
    %164 = vector.load %arg6[%c0_85, %c3_86, %c0_87, %c0_88] : memref<1x4x8x128xf32, #tpu.memory_space<vmem>>, vector<1x1x8x128xf32>
    %165 = vector.shape_cast %164 : vector<1x1x8x128xf32> to vector<8x128xf32>
    %166 = arith.addf %165, %121 : vector<8x128xf32>
    %c0_89 = arith.constant 0 : index
    %c3_90 = arith.constant 3 : index
    %c0_91 = arith.constant 0 : index
    %c0_92 = arith.constant 0 : index
    %167 = vector.load %arg6[%c0_89, %c3_90, %c0_91, %c0_92] : memref<1x4x8x128xf32, #tpu.memory_space<vmem>>, vector<1x1x8x128xf32>
    %168 = vector.shape_cast %167 : vector<1x1x8x128xf32> to vector<8x128xf32>
    %169 = vector.shape_cast %166 : vector<8x128xf32> to vector<1x1x8x128xf32>
    tpu.vector_store %arg6[%c0_89, %c3_90, %c0_91, %c0_92], %169 {strides = array<i32>} : memref<1x4x8x128xf32, #tpu.memory_space<vmem>>, vector<1x1x8x128xf32>,
    %c0_93 = arith.constant 0 : index
    %c0_94 = arith.constant 0 : index
    %c0_95 = arith.constant 0 : index
    %170 = vector.load %arg7[%c0_93, %c0_94, %c0_95] : memref<1x8x128xf32, #tpu.memory_space<vmem>>, vector<1x8x128xf32>
    %171 = vector.shape_cast %170 : vector<1x8x128xf32> to vector<8x128xf32>
    %172 = arith.addf %171, %114 : vector<8x128xf32>
    %c0_96 = arith.constant 0 : index
    %c0_97 = arith.constant 0 : index
    %c0_98 = arith.constant 0 : index
    %173 = vector.load %arg7[%c0_96, %c0_97, %c0_98] : memref<1x8x128xf32, #tpu.memory_space<vmem>>, vector<1x8x128xf32>
    %174 = vector.shape_cast %173 : vector<1x8x128xf32> to vector<8x128xf32>
    %175 = vector.shape_cast %172 : vector<8x128xf32> to vector<1x8x128xf32>
    tpu.vector_store %arg7[%c0_96, %c0_97, %c0_98], %175 {strides = array<i32>} : memref<1x8x128xf32, #tpu.memory_space<vmem>>, vector<1x8x128xf32>,
    return
  }
  func.func @transform_0(%arg0: i32, %arg1: i32, %arg2: i32) -> (i32, i32, i32, i32) {
    %c1_i32 = arith.constant 1 : i32
    %0 = arith.muli %arg1, %c1_i32 : i32
    %1 = arith.addi %0, %arg2 : i32
    %c0_i32 = arith.constant 0 : i32
    %c0_i32_0 = arith.constant 0 : i32
    %c0_i32_1 = arith.constant 0 : i32
    return %arg0, %c0_i32, %1, %c0_i32_0 : i32, i32, i32, i32
  }
  func.func @transform_1(%arg0: i32, %arg1: i32, %arg2: i32) -> (i32, i32, i32, i32) {
    %c1_i32 = arith.constant 1 : i32
    %0 = arith.muli %arg1, %c1_i32 : i32
    %1 = arith.addi %0, %arg2 : i32
    %c0_i32 = arith.constant 0 : i32
    %c0_i32_0 = arith.constant 0 : i32
    %c0_i32_1 = arith.constant 0 : i32
    return %arg0, %c0_i32, %1, %c0_i32_0 : i32, i32, i32, i32
  }
  func.func @transform_2(%arg0: i32, %arg1: i32, %arg2: i32) -> (i32, i32, i32, i32) {
    %c1_i32 = arith.constant 1 : i32
    %0 = arith.muli %arg0, %c1_i32 : i32
    %1 = arith.addi %0, %arg1 : i32
    %c0_i32 = arith.constant 0 : i32
    %c0_i32_0 = arith.constant 0 : i32
    %c0_i32_1 = arith.constant 0 : i32
    %c0_i32_2 = arith.constant 0 : i32
    return %1, %c0_i32, %c0_i32_0, %c0_i32_1 : i32, i32, i32, i32
  }
  func.func @transform_3(%arg0: i32, %arg1: i32, %arg2: i32) -> (i32, i32, i32, i32) {
    %c1_i32 = arith.constant 1 : i32
    %0 = arith.muli %arg0, %c1_i32 : i32
    %1 = arith.addi %0, %arg1 : i32
    %c0_i32 = arith.constant 0 : i32
    %c0_i32_0 = arith.constant 0 : i32
    %c0_i32_1 = arith.constant 0 : i32
    %c0_i32_2 = arith.constant 0 : i32
    return %1, %c0_i32, %c0_i32_0, %c0_i32_1 : i32, i32, i32, i32
  }
  func.func @transform_4(%arg0: i32, %arg1: i32, %arg2: i32) -> (i32, i32, i32) {
    %c1_i32 = arith.constant 1 : i32
    %0 = arith.muli %arg0, %c1_i32 : i32
    %1 = arith.addi %0, %arg1 : i32
    %c0_i32 = arith.constant 0 : i32
    %c0_i32_0 = arith.constant 0 : i32
    %c0_i32_1 = arith.constant 0 : i32
    return %1, %c0_i32, %c0_i32_0 : i32, i32, i32
  }
}

</mosaic_0001>

<llo_original>
// kernel: tpu_custom_call.1
$region0: #{tpu_custom_call.1}
  #allocation0 [shape = 'u32[]', space=smem, size = 0x4, offset = 0x4, fixed_abs, tag = 'smem constant byte address 0x4 - core index']
  #allocation1 [shape = 'u32[144,128]{1,0:T(1,128)}', space=vmem, size = 0x12000, scoped, tag = 'internal scratch']
  %s0 = inlined_call_operand.hbm [shape: f32[2,4,8,128], index: 0, kind: input, shape index: {}]
  %s1 = inlined_call_operand.hbm [shape: f32[2,4,8,128], index: 1, kind: input, shape index: {}]
  %s2 = inlined_call_operand.hbm [shape: f32[2,4,8,128], index: 2, kind: output, shape index: {0}]
  %s3 = inlined_call_operand.hbm [shape: f32[2,4,8,128], index: 3, kind: output, shape index: {1}]
  %s4 = inlined_call_operand.hbm [shape: f32[2,8,128], index: 4, kind: output, shape index: {2}]
  %5 = xla_tuple %s2, %s3, %s4
  %s6 = sld [smem:[#allocation0]]
  $region69: #{tpu_custom_call.1} parent=0
    _
  %s8 = ssub.s32 1, %s6
  %s9 = scalar_select 0, %s8, %s6
  $region1: #{tpu_custom_call.1} parent=0
    #allocation2 [shape = 'u8[32768]{0}', space=vmem, size = 0x8000, scoped, tag = 'input window, operand 0']
    #allocation3 [shape = 's32[2]{0}', space=sflag, size = 0x8, scoped, tag = 'scoped memory for tpu_custom_call.1']
    #allocation4 [shape = 's32[2]{0}', space=sflag, size = 0x8, scoped, tag = 'scoped memory for tpu_custom_call.1']
    #allocation5 [shape = 'u8[32768]{0}', space=vmem, size = 0x8000, scoped, tag = 'input window, operand 1']
    #allocation6 [shape = 's32[2]{0}', space=sflag, size = 0x8, scoped, tag = 'scoped memory for tpu_custom_call.1']
    #allocation7 [shape = 'u8[32768]{0}', space=vmem, size = 0x8000, scoped, tag = 'output window, operand 0']
    #allocation8 [shape = 'u8[32768]{0}', space=vmem, size = 0x8000, scoped, tag = 'output window, operand 1']
    #allocation9 [shape = 's32[2]{0}', space=sflag, size = 0x8, scoped, tag = 'scoped memory for tpu_custom_call.1']
    #allocation10 [shape = 'u8[8192]{0}', space=vmem, size = 0x2000, scoped, tag = 'output window, operand 2']
    %10 = vsyncpa [#allocation3], 0
    %s11 = scalar_lea.sflag [#allocation3], 1
    %12 = vsyncpa %s11, 0
    %13 = vsyncpa [#allocation6], 0
    %s14 = scalar_lea.sflag [#allocation6], 1
    %15 = vsyncpa %s14, 0
    %16 = vsyncpa [#allocation4], 0
    %s17 = scalar_lea.sflag [#allocation4], 1
    %18 = vsyncpa %s17, 0
    %19 = vsyncpa [#allocation9], 0
    %s20 = scalar_lea.sflag [#allocation9], 1
    %21 = vsyncpa %s20, 0
    loop: start=0, step=1, limit=4
    $region2: #{tpu_custom_call.1} parent=1 // loop_pre_header
      _
    $region3: #{tpu_custom_call.1} parent=1 // loop_header
      %s23 = sphi 0, %s27
      %p24 = scmp.ge.s32.totalorder %s23, 4
      %s30 = sphi 0, %s49
      %s31 = sphi 0, %s45
      %s32 = sphi 0, %s41
      %s33 = sphi 0, %s30
      %s34 = sphi 0, %s31
      %s35 = sphi 0, %s32
      %s36 = sphi 0, %s33
      %s37 = sphi 0, %s34
      %s38 = sphi 0, %s35
      %s56 = sphi 0, %s58
      %s59 = sphi 0, %s56
      %s60 = sphi 0, %s59
      %s76 = sphi 0, %s60
      %s86 = sphi 0, %s88
      %s89 = sphi 0, %s86
      %s90 = sphi 0, %s89
      %s106 = sphi 0, %s90
      %s114 = sphi 0, %s116
      %s117 = sphi 0, %s114
      %s118 = sphi 0, %s117
      %s134 = sphi 0, %s118
      %s142 = sphi 0, %s144
      %s145 = sphi 0, %s142
      %s146 = sphi 0, %s145
      %s162 = sphi 0, %s146
      %s170 = sphi 0, %s172
      %s173 = sphi 0, %s170
      %s174 = sphi 0, %s173
      %s190 = sphi 0, %s174
    $region4: #{tpu_custom_call.1} parent=1 // loop_header_branch
      %26 = sbr.rel (%p24) target = $region8
    $region5: #{tpu_custom_call.1} parent=1 // loop_body
      %s28 = ssub.s32 %s23, 1
      %s29 = ssub.s32 %s23, 2
      %s39 = sadd.s32 1, %s32
      %p40 = scmp.ge.s32.totalorder %s39, 1
      %s41 = scalar_select %p40, 0, %s39
      %s42 = sadd.s32 1, %s31
      %s43 = scalar_select %p40, %s42, %s31
      %p44 = scmp.ge.s32.totalorder %s43, 1
      %s45 = scalar_select %p44, 0, %s43
      %s46 = sadd.s32 1, %s30
      %s47 = scalar_select %p44, %s46, %s30
      %p48 = scmp.ge.s32.totalorder %s47, 2
      %s49 = scalar_select %p48, 0, %s47
      %s50 = sadd.s32 %s31, %s32
      %s51 = sadd.s32 %s45, %s41
      %s52 = ssub.s32 %s30, %s49
      %s53 = ssub.s32 %s50, %s51
      %s54 = sor.u32 %s52, %s53
      %p55 = scmp.eq.s32.totalorder %s54, 0
      %s57 = sadd.s32 %s56, 1
      %s58 = scalar_select %p55, %s56, %s57
      %p61 = pneg %p55
      %p62 = scmp.eq.s32.totalorder %s23, 1
      %p63 = por %p61, %p62
      %p64 = scmp.ne.s32.totalorder %s56, %s59
      %p65 = scmp.eq.s32.totalorder %s23, 0
      %p66 = por %p64, %p65
      %p67 = scmp.ne.s32.totalorder %s56, %s59
      %p68 = scmp.eq.s32.totalorder %s28, 1
      %p69 = por %p67, %p68
      %p70 = scmp.ne.s32.totalorder %s59, %s60
      %p71 = scmp.eq.s32.totalorder %s28, 0
      %p72 = por %p70, %p71
      %p73 = scmp.ne.s32.totalorder %s59, %s60
      %p74 = scmp.eq.s32.totalorder %s29, 1
      %p75 = por %p73, %p74
      %p77 = scmp.ne.s32.totalorder %s60, %s76
      %p78 = scmp.eq.s32.totalorder %s29, 0
      %p79 = por %p77, %p78
      %s80 = sadd.s32 %s31, %s32
      %s81 = sadd.s32 %s45, %s41
      %s82 = ssub.s32 %s30, %s49
      %s83 = ssub.s32 %s80, %s81
      %s84 = sor.u32 %s82, %s83
      %p85 = scmp.eq.s32.totalorder %s84, 0
      %s87 = sadd.s32 %s86, 1
      %s88 = scalar_select %p85, %s86, %s87
      %p91 = pneg %p85
      %p92 = scmp.eq.s32.totalorder %s23, 1
      %p93 = por %p91, %p92
      %p94 = scmp.ne.s32.totalorder %s86, %s89
      %p95 = scmp.eq.s32.totalorder %s23, 0
      %p96 = por %p94, %p95
      %p97 = scmp.ne.s32.totalorder %s86, %s89
      %p98 = scmp.eq.s32.totalorder %s28, 1
      %p99 = por %p97, %p98
      %p100 = scmp.ne.s32.totalorder %s89, %s90
      %p101 = scmp.eq.s32.totalorder %s28, 0
      %p102 = por %p100, %p101
      %p103 = scmp.ne.s32.totalorder %s89, %s90
      %p104 = scmp.eq.s32.totalorder %s29, 1
      %p105 = por %p103, %p104
      %p107 = scmp.ne.s32.totalorder %s90, %s106
      %p108 = scmp.eq.s32.totalorder %s29, 0
      %p109 = por %p107, %p108
      %s110 = sadd.s32 %s30, %s31
      %s111 = sadd.s32 %s49, %s45
      %s112 = ssub.s32 %s110, %s111
      %p113 = scmp.eq.s32.totalorder %s112, 0
      %s115 = sadd.s32 %s114, 1
      %s116 = scalar_select %p113, %s114, %s115
      %p119 = pneg %p113
      %p120 = scmp.eq.s32.totalorder %s23, 1
      %p121 = por %p119, %p120
      %p122 = scmp.ne.s32.totalorder %s114, %s117
      %p123 = scmp.eq.s32.totalorder %s23, 0
      %p124 = por %p122, %p123
      %p125 = scmp.ne.s32.totalorder %s114, %s117
      %p126 = scmp.eq.s32.totalorder %s28, 1
      %p127 = por %p125, %p126
      %p128 = scmp.ne.s32.totalorder %s117, %s118
      %p129 = scmp.eq.s32.totalorder %s28, 0
      %p130 = por %p128, %p129
      %p131 = scmp.ne.s32.totalorder %s117, %s118
      %p132 = scmp.eq.s32.totalorder %s29, 1
      %p133 = por %p131, %p132
      %p135 = scmp.ne.s32.totalorder %s118, %s134
      %p136 = scmp.eq.s32.totalorder %s29, 0
      %p137 = por %p135, %p136
      %s138 = sadd.s32 %s30, %s31
      %s139 = sadd.s32 %s49, %s45
      %s140 = ssub.s32 %s138, %s139
      %p141 = scmp.eq.s32.totalorder %s140, 0
      %s143 = sadd.s32 %s142, 1
      %s144 = scalar_select %p141, %s142, %s143
      %p147 = pneg %p141
      %p148 = scmp.eq.s32.totalorder %s23, 1
      %p149 = por %p147, %p148
      %p150 = scmp.ne.s32.totalorder %s142, %s145
      %p151 = scmp.eq.s32.totalorder %s23, 0
      %p152 = por %p150, %p151
      %p153 = scmp.ne.s32.totalorder %s142, %s145
      %p154 = scmp.eq.s32.totalorder %s28, 1
      %p155 = por %p153, %p154
      %p156 = scmp.ne.s32.totalorder %s145, %s146
      %p157 = scmp.eq.s32.totalorder %s28, 0
      %p158 = por %p156, %p157
      %p159 = scmp.ne.s32.totalorder %s145, %s146
      %p160 = scmp.eq.s32.totalorder %s29, 1
      %p161 = por %p159, %p160
      %p163 = scmp.ne.s32.totalorder %s146, %s162
      %p164 = scmp.eq.s32.totalorder %s29, 0
      %p165 = por %p163, %p164
      %s166 = sadd.s32 %s30, %s31
      %s167 = sadd.s32 %s49, %s45
      %s168 = ssub.s32 %s166, %s167
      %p169 = scmp.eq.s32.totalorder %s168, 0
      %s171 = sadd.s32 %s170, 1
      %s172 = scalar_select %p169, %s170, %s171
      %p175 = pneg %p169
      %p176 = scmp.eq.s32.totalorder %s23, 1
      %p177 = por %p175, %p176
      %p178 = scmp.ne.s32.totalorder %s170, %s173
      %p179 = scmp.eq.s32.totalorder %s23, 0
      %p180 = por %p178, %p179
      %p181 = scmp.ne.s32.totalorder %s170, %s173
      %p182 = scmp.eq.s32.totalorder %s28, 1
      %p183 = por %p181, %p182
      %p184 = scmp.ne.s32.totalorder %s173, %s174
      %p185 = scmp.eq.s32.totalorder %s28, 0
      %p186 = por %p184, %p185
      %p187 = scmp.ne.s32.totalorder %s173, %s174
      %p188 = scmp.eq.s32.totalorder %s29, 1
      %p189 = por %p187, %p188
      %p191 = scmp.ne.s32.totalorder %s174, %s190
      %p192 = scmp.eq.s32.totalorder %s29, 0
      %p193 = por %p191, %p192
      %p194 = scmp.le.s32.totalorder 1, %s23
      %p195 = scmp.lt.s32.totalorder %s23, 3
      %p196 = pnand %p194, %p195
      %p197 = pneg %p196
      // Predicated region
      $region9: #{tpu_custom_call.1} parent=5 // pred_check
        _
      $region10: #{tpu_custom_call.1} parent=5 // pred_check_branch
        %199 = sbr.rel (%p196) target = $region12
      $region11: #{tpu_custom_call.1} parent=5 // pred_region
        %s200 = ssub.s32 %s23, 1
      $region12: #{tpu_custom_call.1} parent=5 // pred_fallthru
        _
      %p201 = scmp.lt.s32.totalorder %s23, 2
      // Predicated region
      $region13: #{tpu_custom_call.1} parent=5 // pred_check
        %p202 = pneg %p201
      $region14: #{tpu_custom_call.1} parent=5 // pred_check_branch
        %204 = sbr.rel (%p202) target = $region16
      $region15: #{tpu_custom_call.1} parent=5 // pred_region
        // Predicated region
        $region17: #{tpu_custom_call.1} parent=15 // pred_check
          %p205 = pneg %p66
        $region18: #{tpu_custom_call.1} parent=15 // pred_check_branch
          %207 = sbr.rel (%p205) target = $region20
        $region19: #{tpu_custom_call.1} parent=15 // pred_region
          %s208 = sand.u32 %s56, 1
          %s209 = scalar_lea.sflag [#allocation3], %s208
          %s210 = sand.u32 %s56, 1
          %s211 = smul.addr %s210, 32
          %s212 = scalar_lea.vmem [#allocation2], %s211
          %s213 = sadd.s32 %s31, %s32
          %s215 = ssub.s32 512, 512
          %216 = vsyncadd %s209, %s215
          %s217 = smul.addr %s30, 4
          %s218 = sadd.s32 %s213, %s217
          %s219 = smul.addr %s218, 128
          %s220 = scalar_lea.hbm %s0, %s219
          %s221 = sshll.u32 %s212, 4
          %s222 = int_to_ptr.vmem [resolvable:$true] %s221
          %227 = dma.hbm_to_vmem [thread:$0]  %s220, 512, %s222, %s209, 128, 128, 8
        $region20: #{tpu_custom_call.1} parent=15 // pred_fallthru
          _
        // Predicated region
        $region21: #{tpu_custom_call.1} parent=15 // pred_check
          %p228 = pneg %p96
        $region22: #{tpu_custom_call.1} parent=15 // pred_check_branch
          %230 = sbr.rel (%p228) target = $region24
        $region23: #{tpu_custom_call.1} parent=15 // pred_region
          %s231 = sand.u32 %s86, 1
          %s232 = scalar_lea.sflag [#allocation6], %s231
          %s233 = sand.u32 %s86, 1
          %s234 = smul.addr %s233, 32
          %s235 = scalar_lea.vmem [#allocation5], %s234
          %s236 = sadd.s32 %s31, %s32
          %s238 = ssub.s32 512, 512
          %239 = vsyncadd %s232, %s238
          %s240 = smul.addr %s30, 4
          %s241 = sadd.s32 %s236, %s240
          %s242 = smul.addr %s241, 128
          %s243 = scalar_lea.hbm %s1, %s242
          %s244 = sshll.u32 %s235, 4
          %s245 = int_to_ptr.vmem [resolvable:$true] %s244
          %250 = dma.hbm_to_vmem [thread:$0]  %s243, 512, %s245, %s232, 128, 128, 8
        $region24: #{tpu_custom_call.1} parent=15 // pred_fallthru
          _
      $region16: #{tpu_custom_call.1} parent=5 // pred_fallthru
        _
      %p251 = scmp.le.s32.totalorder 1, %s23
      %p252 = scmp.lt.s32.totalorder %s23, 3
      %p253 = pnand %p251, %p252
      %p254 = pneg %p253
      // Predicated region
      $region25: #{tpu_custom_call.1} parent=5 // pred_check
        _
      $region26: #{tpu_custom_call.1} parent=5 // pred_check_branch
        %256 = sbr.rel (%p253) target = $region28
      $region27: #{tpu_custom_call.1} parent=5 // pred_region
        %s257 = ssub.s32 %s23, 1
        %s258 = sand.u32 %s59, 1
        %s259 = scalar_lea.sflag [#allocation3], %s258
        %s260 = sand.u32 %s59, 1
        %s261 = smul.addr %s260, 32
        %s262 = scalar_lea.vmem [#allocation2], %s261
        // Predicated region
        $region29: #{tpu_custom_call.1} parent=27 // pred_check
          %p263 = pneg %p72
        $region30: #{tpu_custom_call.1} parent=27 // pred_check_branch
          %265 = sbr.rel (%p263) target = $region32
        $region31: #{tpu_custom_call.1} parent=27 // pred_region
          %266 = dma.done %s259, 512
        $region32: #{tpu_custom_call.1} parent=27 // pred_fallthru
          _
        %s267 = sand.u32 %s89, 1
        %s268 = scalar_lea.sflag [#allocation6], %s267
        %s269 = sand.u32 %s89, 1
        %s270 = smul.addr %s269, 32
        %s271 = scalar_lea.vmem [#allocation5], %s270
        // Predicated region
        $region33: #{tpu_custom_call.1} parent=27 // pred_check
          %p272 = pneg %p102
        $region34: #{tpu_custom_call.1} parent=27 // pred_check_branch
          %274 = sbr.rel (%p272) target = $region36
        $region35: #{tpu_custom_call.1} parent=27 // pred_region
          %275 = dma.done %s268, 512
        $region36: #{tpu_custom_call.1} parent=27 // pred_fallthru
          _
        %s276 = sand.u32 %s59, 1
        %s277 = scalar_lea.sflag [#allocation3], %s276
        %s278 = sand.u32 %s59, 1
        %s279 = smul.addr %s278, 32
        %s280 = scalar_lea.vmem [#allocation2], %s279
        %p281 = pneg %p72
        %p282 = pneg %p69
        %s283 = sand.u32 %s89, 1
        %s284 = scalar_lea.sflag [#allocation6], %s283
        %s285 = sand.u32 %s89, 1
        %s286 = smul.addr %s285, 32
        %s287 = scalar_lea.vmem [#allocation5], %s286
        %p288 = pneg %p102
        %p289 = pneg %p99
        %p290 = pneg %p130
        %p291 = pneg %p127
        %s292 = sand.u32 %s117, 1
        %s293 = scalar_lea.sflag [#allocation4], %s292
        %s294 = sand.u32 %s117, 1
        %s295 = smul.addr %s294, 32
        %s296 = scalar_lea.vmem [#allocation7], %s295
        %p297 = pneg %p158
        %p298 = pneg %p155
        %s299 = sand.u32 %s28, 1
        %s300 = scalar_lea.sflag [#allocation9], %s299
        %s301 = sand.u32 %s145, 1
        %s302 = smul.addr %s301, 32
        %s303 = scalar_lea.vmem [#allocation8], %s302
        %p304 = pneg %p186
        %p305 = pneg %p183
        %s306 = sand.u32 %s28, 1
        %s307 = scalar_lea.sflag [#allocation9], %s306
        %s308 = sand.u32 %s173, 1
        %s309 = smul.addr %s308, 8
        %s310 = scalar_lea.vmem [#allocation10], %s309
        %s311 = sadd.s32 %s34, %s35
        %s312 = sadd.s32 %s34, %s35
        %s313 = sadd.s32 %s33, %s34
        %s314 = sadd.s32 %s33, %s34
        %s315 = sadd.s32 %s33, %s34
        %p316 = scmp.eq.s32.totalorder %s35, 0
        // Predicated region
        $region37: #{tpu_custom_call.1} parent=27 // pred_check
          %p317 = pneg %p316
        $region38: #{tpu_custom_call.1} parent=27 // pred_check_branch
          %319 = sbr.rel (%p317) target = $region40
        $region39: #{tpu_custom_call.1} parent=27 // pred_region
          %320 = vst [vmem:[%s296] sm:$0xff] 0.0
          %321 = vst [vmem:[%s296 + $0x8] sm:$0xff] 0.0
          %322 = vst [vmem:[%s296 + $0x10] sm:$0xff] 0.0
          %323 = vst [vmem:[%s296 + $0x18] sm:$0xff] 0.0
          %324 = vst [vmem:[%s303] sm:$0xff] 0.0
          %325 = vst [vmem:[%s303 + $0x8] sm:$0xff] 0.0
          %326 = vst [vmem:[%s303 + $0x10] sm:$0xff] 0.0
          %327 = vst [vmem:[%s303 + $0x18] sm:$0xff] 0.0
          %328 = vst [vmem:[%s310] sm:$0xff] 0.0
        $region40: #{tpu_custom_call.1} parent=27 // pred_fallthru
          _
        %s329 = sadd.s32 %s34, %s35
        %s330 = smul.u32 %s329, 8
        %v331 = vld [vmem:[%s262] sm:$0xff]
        %s332 = sadd.s32 0, 8
        %s333 = scalar_lea.vmem %s262, %s332 [#allocation2]
        %v334 = vld [vmem:[%s333] sm:$0xff]
        %s335 = sadd.s32 0, 16
        %s336 = scalar_lea.vmem %s262, %s335 [#allocation2]
        %v337 = vld [vmem:[%s336] sm:$0xff]
        %s338 = sadd.s32 0, 24
        %s339 = scalar_lea.vmem %s262, %s338 [#allocation2]
        %v340 = vld [vmem:[%s339] sm:$0xff]
        %v341 = vld [vmem:[%s271] sm:$0xff]
        %s342 = scalar_lea.vmem %s271, %s332 [#allocation5]
        %v343 = vld [vmem:[%s342] sm:$0xff]
        %s344 = scalar_lea.vmem %s271, %s335 [#allocation5]
        %v345 = vld [vmem:[%s344] sm:$0xff]
        %s346 = scalar_lea.vmem %s271, %s338 [#allocation5]
        %v347 = vld [vmem:[%s346] sm:$0xff]
        %v348 = vmax.f32 %v331, %v334
        %v349 = vmax.f32 %v348, %v337
        %v350 = vmax.f32 %v349, %v340
        %v351 = vsub.f32 %v331, %v350
        %v352 = vsub.f32 %v334, %v350
        %v353 = vsub.f32 %v337, %v350
        %v354 = vsub.f32 %v340, %v350
        %v355 = vmul.f32 %v351, 1.442695
        %v356 = vpow.pop %v355
        %v357 = vmul.f32 %v352, 1.442695
        %v358 = vpow.pop %v357
        %v359 = vmul.f32 %v353, 1.442695
        %v360 = vpow.pop %v359
        %v361 = vmul.f32 %v354, 1.442695
        %v362 = vpow.pop %v361
        %v363 = vadd.f32 %v356, %v358
        %v364 = vadd.f32 %v363, %v360
        %v365 = vadd.f32 %v364, %v362
        %v366 = vrcp.pop %v365
        %v367 = vmul.f32 1.0, %v366
        %v368 = vlog2.pop %v365
        %v369 = vmul.f32 %v368, 0.6931472
        %s370 = sadd.s32 %s330, 0
        %v371 = vlaneseq
        %v372 = vshrl.u32 %v371, 7
        %v373 = vstv %s370
        %v374 = vadd.s32 %v373, %v372
        %v375 = vlaneseq
        %v376 = vand.u32 %v375, 127
        %v377 = vmul.u32 %v374, 128
        %v378 = vadd.s32 %v377, %v376
        %vm379 = vcmp.lt.s32.totalorder %v378, 256
        %v380 = vsel %vm379, 1, 0
        %v381 = vcvt.s32.f32 %v380
        %v382 = vmul.f32 %v356, %v367
        %v383 = vsub.f32 %v351, %v369
        %v384 = vsub.f32 1.0, %v382
        %v385 = vmul.f32 %v384, %v384
        %v386 = vmul.f32 %v385, %v383
        %v387 = vmul.f32 %v386, %v341
        %v388 = vsub.f32 0.0, %v387
        %v389 = vmul.f32 %v382, %v381
        %v390 = vadd.f32 %v389, 0.0
        %v391 = vand.u32 2147483647, %v341
        %v392 = vadd.f32 %v390, %v391
        %v393 = vsub.f32 %v389, %v341
        %v394 = vand.u32 2147483647, %v393
        %v395 = vadd.f32 %v394, 0.0
        %v396 = vmul.f32 %v358, %v367
        %v397 = vsub.f32 %v352, %v369
        %v398 = vsub.f32 1.0, %v396
        %v399 = vmul.f32 %v398, %v398
        %v400 = vmul.f32 %v399, %v397
        %v401 = vmul.f32 %v400, %v343
        %v402 = vsub.f32 %v388, %v401
        %v403 = vmul.f32 %v396, %v381
        %v404 = vadd.f32 %v403, 0.0
        %v405 = vand.u32 2147483647, %v343
        %v406 = vadd.f32 %v404, %v405
        %v407 = vsub.f32 %v403, %v343
        %v408 = vand.u32 2147483647, %v407
        %v409 = vadd.f32 %v408, 0.0
        %v410 = vmul.f32 %v360, %v367
        %v411 = vsub.f32 %v353, %v369
        %v412 = vsub.f32 1.0, %v410
        %v413 = vmul.f32 %v412, %v412
        %v414 = vmul.f32 %v413, %v411
        %v415 = vmul.f32 %v414, %v345
        %v416 = vsub.f32 %v402, %v415
        %v417 = vmul.f32 %v410, %v381
        %v418 = vadd.f32 %v417, 0.0
        %v419 = vand.u32 2147483647, %v345
        %v420 = vadd.f32 %v418, %v419
        %v421 = vsub.f32 %v417, %v345
        %v422 = vand.u32 2147483647, %v421
        %v423 = vadd.f32 %v422, 0.0
        %v424 = vmul.f32 %v362, %v367
        %v425 = vsub.f32 %v354, %v369
        %v426 = vsub.f32 1.0, %v424
        %v427 = vmul.f32 %v426, %v426
        %v428 = vmul.f32 %v427, %v425
        %v429 = vmul.f32 %v428, %v347
        %v430 = vsub.f32 %v416, %v429
        %v431 = vmul.f32 %v424, %v381
        %v432 = vadd.f32 %v431, 0.0
        %v433 = vand.u32 2147483647, %v347
        %v434 = vadd.f32 %v432, %v433
        %v435 = vsub.f32 %v431, %v347
        %v436 = vand.u32 2147483647, %v435
        %v437 = vadd.f32 %v436, 0.0
        %v438 = vld [vmem:[%s296] sm:$0xff]
        %v439 = vadd.f32 %v438, %v392
        %440 = vst [vmem:[%s296] sm:$0xff] %v439
        %v441 = vld [vmem:[%s303] sm:$0xff]
        %v442 = vadd.f32 %v441, %v395
        %443 = vst [vmem:[%s303] sm:$0xff] %v442
        %s444 = scalar_lea.vmem %s296, 8 [#allocation7]
        %v445 = vld [vmem:[%s444] sm:$0xff]
        %v446 = vadd.f32 %v445, %v406
        %447 = vst [vmem:[%s444] sm:$0xff] %v446
        %s448 = scalar_lea.vmem %s303, 8 [#allocation8]
        %v449 = vld [vmem:[%s448] sm:$0xff]
        %v450 = vadd.f32 %v449, %v409
        %451 = vst [vmem:[%s448] sm:$0xff] %v450
        %s452 = scalar_lea.vmem %s296, 16 [#allocation7]
        %v453 = vld [vmem:[%s452] sm:$0xff]
        %v454 = vadd.f32 %v453, %v420
        %455 = vst [vmem:[%s452] sm:$0xff] %v454
        %s456 = scalar_lea.vmem %s303, 16 [#allocation8]
        %v457 = vld [vmem:[%s456] sm:$0xff]
        %v458 = vadd.f32 %v457, %v423
        %459 = vst [vmem:[%s456] sm:$0xff] %v458
        %s460 = scalar_lea.vmem %s296, 24 [#allocation7]
        %v461 = vld [vmem:[%s460] sm:$0xff]
        %v462 = vadd.f32 %v461, %v434
        %463 = vst [vmem:[%s460] sm:$0xff] %v462
        %s464 = scalar_lea.vmem %s303, 24 [#allocation8]
        %v465 = vld [vmem:[%s464] sm:$0xff]
        %v466 = vadd.f32 %v465, %v437
        %467 = vst [vmem:[%s464] sm:$0xff] %v466
        %v468 = vld [vmem:[%s310] sm:$0xff]
        %v469 = vadd.f32 %v468, %v430
        %470 = vst [vmem:[%s310] sm:$0xff] %v469
        %s471 = sand.u32 %s117, 1
        %s472 = scalar_lea.sflag [#allocation4], %s471
        %s473 = sand.u32 %s117, 1
        %s474 = smul.addr %s473, 32
        %s475 = scalar_lea.vmem [#allocation7], %s474
        %s476 = sand.u32 %s28, 1
        %s477 = scalar_lea.sflag [#allocation9], %s476
        %s478 = sand.u32 %s145, 1
        %s479 = smul.addr %s478, 32
        %s480 = scalar_lea.vmem [#allocation8], %s479
        %s481 = sand.u32 %s28, 1
        %s482 = scalar_lea.sflag [#allocation9], %s481
        %s483 = sand.u32 %s173, 1
        %s484 = smul.addr %s483, 8
        %s485 = scalar_lea.vmem [#allocation10], %s484
        // Predicated region
        $region41: #{tpu_custom_call.1} parent=27 // pred_check
          %p486 = pneg %p127
        $region42: #{tpu_custom_call.1} parent=27 // pred_check_branch
          %488 = sbr.rel (%p486) target = $region44
        $region43: #{tpu_custom_call.1} parent=27 // pred_region
          %s489 = sadd.s32 %s33, %s34
          %s491 = ssub.s32 512, 512
          %492 = vsyncadd %s472, %s491
          %s493 = smul.addr %s489, 4
          %s494 = smul.addr %s493, 128
          %s495 = scalar_lea.hbm %s2, %s494
          %s496 = sshll.u32 %s475, 4
          %s497 = int_to_ptr.vmem [resolvable:$true] %s496
          %502 = dma.vmem_to_hbm [thread:$0]  %s497, 512, %s495, %s472, 128, 128, 8
        $region44: #{tpu_custom_call.1} parent=27 // pred_fallthru
          _
        // Predicated region
        $region45: #{tpu_custom_call.1} parent=27 // pred_check
          %p503 = pneg %p155
        $region46: #{tpu_custom_call.1} parent=27 // pred_check_branch
          %505 = sbr.rel (%p503) target = $region48
        $region47: #{tpu_custom_call.1} parent=27 // pred_region
          %s506 = sadd.s32 %s33, %s34
          %s508 = ssub.s32 512, 512
          %509 = vsyncadd %s477, %s508
          %s510 = smul.addr %s506, 4
          %s511 = smul.addr %s510, 128
          %s512 = scalar_lea.hbm %s3, %s511
          %s513 = sshll.u32 %s480, 4
          %s514 = int_to_ptr.vmem [resolvable:$true] %s513
          %519 = dma.vmem_to_hbm [thread:$0]  %s514, 512, %s512, %s477, 128, 128, 8
        $region48: #{tpu_custom_call.1} parent=27 // pred_fallthru
          _
        // Predicated region
        $region49: #{tpu_custom_call.1} parent=27 // pred_check
          %p520 = pneg %p183
        $region50: #{tpu_custom_call.1} parent=27 // pred_check_branch
          %522 = sbr.rel (%p520) target = $region52
        $region51: #{tpu_custom_call.1} parent=27 // pred_region
          %s523 = sadd.s32 %s33, %s34
          %s525 = ssub.s32 128, 128
          %526 = vsyncadd %s482, %s525
          %s527 = smul.addr %s523, 128
          %s528 = scalar_lea.hbm %s4, %s527
          %s530 = sshll.u32 %s485, 4
          %s531 = int_to_ptr.vmem [resolvable:$true] %s530
          %533 = dma.vmem_to_hbm [thread:$0]  %s531, 128, %s528, %s482
        $region52: #{tpu_custom_call.1} parent=27 // pred_fallthru
          _
      $region28: #{tpu_custom_call.1} parent=5 // pred_fallthru
        _
      %p534 = scmp.le.s32.totalorder 2, %s23
      // Predicated region
      $region53: #{tpu_custom_call.1} parent=5 // pred_check
        %p535 = pneg %p534
      $region54: #{tpu_custom_call.1} parent=5 // pred_check_branch
        %537 = sbr.rel (%p535) target = $region56
      $region55: #{tpu_custom_call.1} parent=5 // pred_region
        %s538 = ssub.s32 %s23, 2
        // Predicated region
        $region57: #{tpu_custom_call.1} parent=55 // pred_check
          %p539 = pneg %p133
        $region58: #{tpu_custom_call.1} parent=55 // pred_check_branch
          %541 = sbr.rel (%p539) target = $region60
        $region59: #{tpu_custom_call.1} parent=55 // pred_region
          %s542 = sand.u32 %s118, 1
          %s543 = scalar_lea.sflag [#allocation4], %s542
          %s544 = sand.u32 %s118, 1
          %s545 = smul.addr %s544, 32
          %s546 = scalar_lea.vmem [#allocation7], %s545
          %547 = dma.done %s543, 512
        $region60: #{tpu_custom_call.1} parent=55 // pred_fallthru
          _
        // Predicated region
        $region61: #{tpu_custom_call.1} parent=55 // pred_check
          %p548 = pneg %p161
        $region62: #{tpu_custom_call.1} parent=55 // pred_check_branch
          %550 = sbr.rel (%p548) target = $region64
        $region63: #{tpu_custom_call.1} parent=55 // pred_region
          %s551 = sand.u32 %s29, 1
          %s552 = scalar_lea.sflag [#allocation9], %s551
          %s553 = sand.u32 %s146, 1
          %s554 = smul.addr %s553, 32
          %s555 = scalar_lea.vmem [#allocation8], %s554
          %556 = dma.done %s552, 512
        $region64: #{tpu_custom_call.1} parent=55 // pred_fallthru
          _
        // Predicated region
        $region65: #{tpu_custom_call.1} parent=55 // pred_check
          %p557 = pneg %p189
        $region66: #{tpu_custom_call.1} parent=55 // pred_check_branch
          %559 = sbr.rel (%p557) target = $region68
        $region67: #{tpu_custom_call.1} parent=55 // pred_region
          %s560 = sand.u32 %s29, 1
          %s561 = scalar_lea.sflag [#allocation9], %s560
          %s562 = sand.u32 %s174, 1
          %s563 = smul.addr %s562, 8
          %s564 = scalar_lea.vmem [#allocation10], %s563
          %565 = dma.done %s561, 128
        $region68: #{tpu_custom_call.1} parent=55 // pred_fallthru
          _
      $region56: #{tpu_custom_call.1} parent=5 // pred_fallthru
        _
    $region6: #{tpu_custom_call.1} parent=1 // loop_footer
      %s27 = sadd.s32 1, %s23
    $region7: #{tpu_custom_call.1} parent=1 // loop_footer_branch
      %22 = sbr.rel target = $region3
    $region8: #{tpu_custom_call.1} parent=1 // loop_exit
      _
    %566 = vsyncpa [#allocation3], 1
    %s567 = scalar_lea.sflag [#allocation3], 1
    %568 = vsyncpa %s567, 1
    %569 = vsyncpa [#allocation6], 1
    %s570 = scalar_lea.sflag [#allocation6], 1
    %571 = vsyncpa %s570, 1
    %572 = vsyncpa [#allocation4], 1
    %s573 = scalar_lea.sflag [#allocation4], 1
    %574 = vsyncpa %s573, 1
    %575 = vsyncpa [#allocation9], 1
    %s576 = scalar_lea.sflag [#allocation9], 1
    %577 = vsyncpa %s576, 1

</llo_original>
